<compile_context>
chip_gen: v7x
topology: tpu7x:2x2x1
jax: 0.10.0
libtpu: 0.0.40
codegen_flags: <defaults>
</compile_context>

<pallas_src>
import functools

import jax
import jax.numpy as jnp
from jax import lax
from jax.experimental import pallas as pl
from jax.experimental.pallas import tpu as pltpu

K = 3                      # kernel size (3x3, module default)
KK = K * K
_LANE = 128                # TPU lane width


def _round_up(a, b):
    return ((a + b - 1) // b) * b


@functools.lru_cache(maxsize=None)
def _hw_config():
    """Generation-aware VMEM / tiling budgets.

    v7x: 64 MiB VMEM per TensorCore and 2 cores -> modest tiles, guarantee
    >= 8 grid steps so both cores get pipelined work.  v5e/v6e: 128 MiB VMEM,
    one core -> bigger tiles, >= 4 steps."""
    try:
        vmem_cap = int(pltpu.get_tpu_info().vmem_capacity_bytes)
    except Exception:
        vmem_cap = 64 * 1024 * 1024            # conservative fallback
    if vmem_cap <= 64 * 1024 * 1024:           # v7x-like
        return dict(vmem_limit=48 * 1024 * 1024,
                    tile_budget=36 * 1024 * 1024,
                    tm_max=512, min_steps=8)
    return dict(vmem_limit=96 * 1024 * 1024,   # v5e / v6e (128 MiB physical)
                tile_budget=72 * 1024 * 1024,
                tm_max=1024, min_steps=4)


def _choose_tm(M, row_bytes):
    """Row-tile size: as large as the VMEM budget allows (these kernels are
    HBM-bound), but keep enough grid steps for software pipelining and (on
    v7x) for both TensorCores to get work."""
    cfg = _hw_config()
    tm = cfg["tm_max"]
    while tm > 8 and 2 * tm * row_bytes > cfg["tile_budget"]:   # double-buffered
        tm //= 2
    while tm > 64 and pl.cdiv(M, tm) < cfg["min_steps"]:
        tm //= 2
    return max(min(tm, _round_up(M, 8)), 8)


# ---------------------------------------------------------------------------
# Glue: im2col for the plain 3x3 convs (offset / modulator branches)
# ---------------------------------------------------------------------------
def _im2col(x, pad, stride):
    """x: (N, C, H, W) -> (N*Ho*Wo, K*K*C) flattened as (kh*K+kw)*C + c."""
    N, C, H, W = x.shape
    sh, sw = stride
    xp = jnp.pad(x, ((0, 0), (0, 0), (pad, pad), (pad, pad)))
    Ho = (H + 2 * pad - K) // sh + 1
    Wo = (W + 2 * pad - K) // sw + 1
    cols = []
    for kh in range(K):
        for kw in range(K):
            cols.append(xp[:, :, kh:kh + sh * Ho:sh, kw:kw + sw * Wo:sw])
    cols = jnp.stack(cols, axis=0)            # (KK, N, C, Ho, Wo)
    cols = cols.transpose(1, 3, 4, 0, 2)      # (N, Ho, Wo, KK, C)
    return cols.reshape(N * Ho * Wo, KK * C), Ho, Wo


def _conv_weight_to_mat(w):
    """(Cout, Cin, K, K) -> (K*K*Cin, Cout), row index = (kh*K+kw)*Cin + cin."""
    return w.transpose(2, 3, 1, 0).reshape(KK * w.shape[1], w.shape[0])


# ---------------------------------------------------------------------------
# Pallas kernel 1: fused offset conv + modulator conv, lane-padded output
# ---------------------------------------------------------------------------
def _offset_mod_pallas(patches, w_cat, b_cat, n_off):
    """One im2col GEMM for both small convs.

    patches: (M, CKK) f32.  w_cat: (CKK, NOP) f32 = [w_off | w_mod | 0-pad]
    with NOP a multiple of 128 (lane-dense, unmasked stores).  Returns
    (M, NOP): columns [0, n_off) are raw offsets, columns [n_off, ...) already
    have 2*sigmoid applied (modulation mask)."""
    M, CKK = patches.shape
    NOP = w_cat.shape[1]
    cfg = _hw_config()
    row_bytes = (CKK + NOP) * 4
    tm = _choose_tm(M, row_bytes)

    def kernel(p_ref, w_ref, b_ref, o_ref):
        r = jnp.dot(p_ref[...], w_ref[...],
                    preferred_element_type=jnp.float32) + b_ref[...]
        lane = lax.broadcasted_iota(jnp.int32, r.shape, 1)
        # offsets pass through; modulator columns get 2*sigmoid(r) == 1+tanh(r/2)
        o_ref[...] = jnp.where(lane < n_off, r, 1.0 + jnp.tanh(0.5 * r))

    return pl.pallas_call(
        kernel,
        out_shape=jax.ShapeDtypeStruct((M, NOP), jnp.float32),
        grid_spec=pltpu.PrefetchScalarGridSpec(
            num_scalar_prefetch=0,
            grid=(pl.cdiv(M, tm),),
            in_specs=[pl.BlockSpec((tm, CKK), lambda i: (i, 0)),
                      pl.BlockSpec((CKK, NOP), lambda i: (0, 0)),
                      pl.BlockSpec((1, NOP), lambda i: (0, 0))],
            out_specs=pl.BlockSpec((tm, NOP), lambda i: (i, 0))),
        compiler_params=pltpu.CompilerParams(
            dimension_semantics=("parallel",),
            vmem_limit_bytes=cfg["vmem_limit"]),
    )(patches, w_cat, b_cat)


# ---------------------------------------------------------------------------
# Glue: bilinear neighbor gather (data-dependent indices -> plain JAX)
# ---------------------------------------------------------------------------
def _bilinear_gather(x, offset_m, stride, pad, Ho, Wo):
    """Single merged gather for the 4 bilinear corners.

    Returns
      v:   (4, M, KK, C) f32 corner samples (corners: y0x0, y0x1, y1x0, y1x1)
      wts: (4, M, KK)    f32 bilinear corner weights (zeroed outside the image)
    """
    N, C, H, W = x.shape
    sh, sw = stride
    P = Ho * Wo
    M = N * P

    # torchvision offset layout: per tap (dy, dx) interleaved along channels.
    # NOTE: this (dy, dx)-interleaved assumption matches the pure-JAX reference
    # below; verify once against torchvision.ops.deform_conv2d if bit-matching
    # the PyTorch module is required.
    off = offset_m.reshape(N, P, KK, 2)
    off_y, off_x = off[..., 0], off[..., 1]

    ho = (jnp.arange(P) // Wo).astype(jnp.float32)
    wo = (jnp.arange(P) % Wo).astype(jnp.float32)
    kh = (jnp.arange(KK) // K).astype(jnp.float32)
    kw = (jnp.arange(KK) % K).astype(jnp.float32)
    base_y = ho[:, None] * sh - pad + kh[None, :]    # (P, KK)
    base_x = wo[:, None] * sw - pad + kw[None, :]

    y = base_y[None] + off_y                         # (N, P, KK)
    xx = base_x[None] + off_x

    y0 = jnp.floor(y)
    x0 = jnp.floor(xx)
    ly, lx = y - y0, xx - x0
    hy, hx = 1.0 - ly, 1.0 - lx

    y0i = y0.astype(jnp.int32)
    x0i = x0.astype(jnp.int32)
    y1i = y0i + 1
    x1i = x0i + 1

    valid = ((y > -1.0) & (y < H) & (xx > -1.0) & (xx < W)).astype(jnp.float32)
    in_y0 = (y0i >= 0).astype(jnp.float32)
    in_y1 = (y1i <= H - 1).astype(jnp.float32)
    in_x0 = (x0i >= 0).astype(jnp.float32)
    in_x1 = (x1i <= W - 1).astype(jnp.float32)

    w00 = hy * hx * valid * in_y0 * in_x0
    w01 = hy * lx * valid * in_y0 * in_x1
    w10 = ly * hx * valid * in_y1 * in_x0
    w11 = ly * lx * valid * in_y1 * in_x1
    wts = jnp.stack([w00, w01, w10, w11], axis=0).reshape(4, M, KK)

    y0c = jnp.clip(y0i, 0, H - 1)
    y1c = jnp.clip(y1i, 0, H - 1)
    x0c = jnp.clip(x0i, 0, W - 1)
    x1c = jnp.clip(x1i, 0, W - 1)

    # one take_along_axis for all four corners (corner-major packing)
    idx = jnp.stack([y0c * W + x0c, y0c * W + x1c,
                     y1c * W + x0c, y1c * W + x1c], axis=1)        # (N, 4, P, KK)
    idx = jnp.broadcast_to(idx.reshape(N, 1, 4 * P * KK), (N, C, 4 * P * KK))
    v = jnp.take_along_axis(x.reshape(N, C, H * W), idx, axis=2)   # (N, C, 4*P*KK)
    v = v.reshape(N, C, 4, P, KK).transpose(2, 0, 3, 4, 1)         # (4, N, P, KK, C)
    v = v.reshape(4, M, KK, C)
    return v, wts


# ---------------------------------------------------------------------------
# Pallas kernel 2: modulated deformable GEMM (plain lane-dense bf16 GEMM)
# ---------------------------------------------------------------------------
def _deform_gemm_pallas(col, w_mat, b_vec):
    """col: (M, KK*Cin) bf16 — bilinearly sampled, modulated, 4-corner
    combined im2col matrix.  w_mat: (KK*Cin, CoutP) bf16 (CoutP multiple of
    128).  b_vec: (1, CoutP) f32.  One fused MXU dot per row tile, f32
    accumulation, lane-dense unmasked output stores.  Returns (M, CoutP) f32
    (crop the Cout columns outside)."""
    M, CKK = col.shape
    CoutP = w_mat.shape[1]
    cfg = _hw_config()
    row_bytes = CKK * 2 + CoutP * 4
    tm = _choose_tm(M, row_bytes)

    def kernel(c_ref, w_ref, b_ref, o_ref):
        o_ref[...] = jnp.dot(c_ref[...], w_ref[...],
                             preferred_element_type=jnp.float32) + b_ref[...]

    return pl.pallas_call(
        kernel,
        out_shape=jax.ShapeDtypeStruct((M, CoutP), jnp.float32),
        grid_spec=pltpu.PrefetchScalarGridSpec(
            num_scalar_prefetch=0,
            grid=(pl.cdiv(M, tm),),
            in_specs=[pl.BlockSpec((tm, CKK), lambda i: (i, 0)),
                      pl.BlockSpec((CKK, CoutP), lambda i: (0, 0)),
                      pl.BlockSpec((1, CoutP), lambda i: (0, 0))],
            out_specs=pl.BlockSpec((tm, CoutP), lambda i: (i, 0))),
        compiler_params=pltpu.CompilerParams(
            dimension_semantics=("parallel",),
            vmem_limit_bytes=cfg["vmem_limit"]),
    )(col, w_mat, b_vec)


# ---------------------------------------------------------------------------
# Full forward (Pallas path) and a pure-JAX reference of the same math
# ---------------------------------------------------------------------------
def control_deformable_conv2d(params, x, f_cont, stride=(1, 1), padding=1):
    N, Cin, H, W = x.shape
    Cout = params["w_reg"].shape[0]

    # ---- offset + modulator 3x3 convs: one fused, lane-padded Pallas GEMM ----
    patches, Ho, Wo = _im2col(f_cont, padding, stride)
    M = N * Ho * Wo
    n_off, n_mod = 2 * KK, KK
    NOP = _round_up(n_off + n_mod, _LANE)
    w_cat = jnp.concatenate([_conv_weight_to_mat(params["w_off"]),
                             _conv_weight_to_mat(params["w_mod"])], axis=1)
    w_cat = jnp.pad(w_cat, ((0, 0), (0, NOP - n_off - n_mod)))
    b_cat = jnp.pad(jnp.concatenate([params["b_off"], params["b_mod"]]),
                    (0, NOP - n_off - n_mod))[None, :]
    offmod = _offset_mod_pallas(patches, w_cat, b_cat, n_off)       # (M, NOP)
    offset_m = offmod[:, :n_off]
    mod_m = offmod[:, n_off:n_off + n_mod]                          # 2*sigmoid done in-kernel

    # ---- data-dependent bilinear gather + modulated 4-corner combine (XLA) ----
    v, wts = _bilinear_gather(x, offset_m, stride, padding, Ho, Wo)
    wts = wts * mod_m[None]                           # fold modulation mask
    col = jnp.sum(wts[..., None] * v, axis=0)         # (M, KK, Cin), fuses with gather
    col = col.reshape(M, KK * Cin).astype(jnp.bfloat16)

    # ---- modulated deformable GEMM (Pallas, bf16 MXU, lane-dense output) ----
    CoutP = _round_up(Cout, _LANE)
    w_mat = jnp.pad(_conv_weight_to_mat(params["w_reg"]),
                    ((0, 0), (0, CoutP - Cout))).astype(jnp.bfloat16)
    b_vec = jnp.pad(params["b_reg"].astype(jnp.float32), (0, CoutP - Cout))[None, :]
    out_m = _deform_gemm_pallas(col, w_mat, b_vec)[:, :Cout]

    return out_m.reshape(N, Ho, Wo, Cout).transpose(0, 3, 1, 2)


def control_deformable_conv2d_ref(params, x, f_cont, stride=(1, 1), padding=1):
    """Same pipeline with plain jnp ops (validates the Pallas kernels)."""
    N, Cin, H, W = x.shape
    Cout = params["w_reg"].shape[0]
    patches, Ho, Wo = _im2col(f_cont, padding, stride)
    M = N * Ho * Wo
    offset_m = patches @ _conv_weight_to_mat(params["w_off"]) + params["b_off"][None, :]
    mod_m = 2.0 * jax.nn.sigmoid(
        patches @ _conv_weight_to_mat(params["w_mod"]) + params["b_mod"][None, :])
    v, wts = _bilinear_gather(x, offset_m, stride, padding, Ho, Wo)
    wts = wts * mod_m[None]
    col = jnp.sum(wts[..., None] * v, axis=0).reshape(M, KK * Cin)
    w_mat = _conv_weight_to_mat(params["w_reg"]).astype(jnp.bfloat16)
    out_m = jnp.dot(col.astype(jnp.bfloat16), w_mat,
                    preferred_element_type=jnp.float32) + params["b_reg"][None, :]
    return out_m.reshape(N, Ho, Wo, Cout).transpose(0, 3, 1, 2)


def init_params(key, in_channels, out_channels, bias=False):
    # NOTE: the PyTorch module zero-initializes the offset/modulator convs,
    # which would make the deformable path degenerate (offset=0, mask=1).
    # We use small deterministic random weights instead so the bilinear
    # sampling / modulation path is actually exercised.
    k1, k2, k3, k4, k5 = jax.random.split(key, 5)
    scale = 0.1
    return {
        "w_off": scale * jax.random.normal(k1, (2 * KK, in_channels, K, K), jnp.float32),
        "b_off": scale * jax.random.normal(k2, (2 * KK,), jnp.float32),
        "w_mod": scale * jax.random.normal(k3, (KK, in_channels, K, K), jnp.float32),
        "b_mod": scale * jax.random.normal(k4, (KK,), jnp.float32),
        "w_reg": scale * jax.random.normal(k5, (out_channels, in_channels, K, K), jnp.float32),
        # regular_conv has bias=False by default -> zero bias
        "b_reg": jnp.zeros((out_channels,), jnp.float32),
    }


if __name__ == "__main__":
    key = jax.random.PRNGKey(0)
    kx, kf, kp = jax.random.split(key, 3)

    N, Cin, H, W = 2, 4, 16, 16
    Cout = 8
    x = jax.random.normal(kx, (N, Cin, H, W), jnp.float32)        # img feature map
    f_cont = jax.random.normal(kf, (N, Cin, H, W), jnp.float32)   # control factor

    params = init_params(kp, Cin, Cout)

    fwd = jax.jit(functools.partial(control_deformable_conv2d,
                                    stride=(1, 1), padding=1))
    out = jax.block_until_ready(fwd(params, x, f_cont))

    # sanity check vs a plain-JAX implementation of the same math
    ref = control_deformable_conv2d_ref(params, x, f_cont, stride=(1, 1), padding=1)
    assert out.shape == (N, Cout, H, W)
    assert bool(jnp.allclose(out, ref, atol=2e-2, rtol=2e-2))

    print("KERNEL_OK")
</pallas_src>

<mosaic_0001>
module attributes {stable_mosaic.version = 11 : i64} {
  func.func @kernel(%arg0: i32, %arg1: memref<64x36xf32, #tpu.memory_space<vmem>>, %arg2: memref<36x128xf32, #tpu.memory_space<vmem>>, %arg3: memref<1x128xf32, #tpu.memory_space<vmem>>, %arg4: memref<64x128xf32, #tpu.memory_space<vmem>>) attributes {dimension_semantics = [#tpu.dimension_semantics<parallel>], iteration_bounds = array<i64: 8>, scalar_prefetch = 0 : i64, scratch_operands = 0 : i64, tpu.core_type = #tpu.core_type<tc>, window_params = [{transform_indices = @transform_0, window_bounds = array<i64: 64, 36>}, {pipeline_mode = #tpu.pipeline_mode<synchronous>, transform_indices = @transform_1, window_bounds = array<i64: 36, 128>}, {pipeline_mode = #tpu.pipeline_mode<synchronous>, transform_indices = @transform_2, window_bounds = array<i64: 1, 128>}, {transform_indices = @transform_3, window_bounds = array<i64: 64, 128>}]} {
    %c0 = arith.constant 0 : index
    %c0_0 = arith.constant 0 : index
    %0 = vector.load %arg1[%c0, %c0_0] : memref<64x36xf32, #tpu.memory_space<vmem>>, vector<64x36xf32>
    %c0_1 = arith.constant 0 : index
    %c0_2 = arith.constant 0 : index
    %1 = vector.load %arg2[%c0_1, %c0_2] : memref<36x128xf32, #tpu.memory_space<vmem>>, vector<36x128xf32>
    %cst = arith.constant dense<0.000000e+00> : vector<64x128xf32>
    %2 = tpu.matmul %0, %1, %cst {dimension_numbers = #tpu.dot_dimension_numbers<[1], [0], [0], [1], [0, 0, 1, 1], [], []>} : vector<64x36xf32>, vector<36x128xf32>, vector<64x128xf32> -> vector<64x128xf32>
    %c0_3 = arith.constant 0 : index
    %c0_4 = arith.constant 0 : index
    %3 = vector.load %arg3[%c0_3, %c0_4] : memref<1x128xf32, #tpu.memory_space<vmem>>, vector<1x128xf32>
    %4 = vector.broadcast %3 : vector<1x128xf32> to vector<64x128xf32>
    %5 = arith.addf %2, %4 : vector<64x128xf32>
    %6 = tpu.iota {dimensions = array<i32: 1>} : vector<64x128xi32>
    %c18_i32 = arith.constant 18 : i32
    %7 = vector.broadcast %c18_i32 : i32 to vector<64x128xi32>
    %8 = arith.cmpi slt, %6, %7 : vector<64x128xi32>
    %cst_5 = arith.constant 5.000000e-01 : f32
    %9 = vector.broadcast %cst_5 : f32 to vector<64x128xf32>
    %10 = arith.mulf %9, %5 : vector<64x128xf32>
    %11 = math.tanh %10 : vector<64x128xf32>
    %cst_6 = arith.constant 1.000000e+00 : f32
    %12 = vector.broadcast %cst_6 : f32 to vector<64x128xf32>
    %13 = arith.addf %12, %11 : vector<64x128xf32>
    %14 = arith.select %8, %5, %13 : vector<64x128xi1>, vector<64x128xf32>
    %c0_7 = arith.constant 0 : index
    %c0_8 = arith.constant 0 : index
    %15 = vector.load %arg4[%c0_7, %c0_8] : memref<64x128xf32, #tpu.memory_space<vmem>>, vector<64x128xf32>
    tpu.vector_store %arg4[%c0_7, %c0_8], %14 {strides = array<i32>} : memref<64x128xf32, #tpu.memory_space<vmem>>, vector<64x128xf32>,
    return
  }
  func.func @transform_0(%arg0: i32) -> (i32, i32) {
    %c0_i32 = arith.constant 0 : i32
    %c0_i32_0 = arith.constant 0 : i32
    return %arg0, %c0_i32 : i32, i32
  }
  func.func @transform_1(%arg0: i32) -> (i32, i32) {
    %c0_i32 = arith.constant 0 : i32
    %c0_i32_0 = arith.constant 0 : i32
    %c0_i32_1 = arith.constant 0 : i32
    return %c0_i32, %c0_i32_0 : i32, i32
  }
  func.func @transform_2(%arg0: i32) -> (i32, i32) {
    %c0_i32 = arith.constant 0 : i32
    %c0_i32_0 = arith.constant 0 : i32
    %c0_i32_1 = arith.constant 0 : i32
    return %c0_i32, %c0_i32_0 : i32, i32
  }
  func.func @transform_3(%arg0: i32) -> (i32, i32) {
    %c0_i32 = arith.constant 0 : i32
    %c0_i32_0 = arith.constant 0 : i32
    return %arg0, %c0_i32 : i32, i32
  }
}

module attributes {stable_mosaic.version = 11 : i64} {
  func.func @kernel(%arg0: i32, %arg1: memref<64x36xbf16, #tpu.memory_space<vmem>>, %arg2: memref<36x128xbf16, #tpu.memory_space<vmem>>, %arg3: memref<1x128xf32, #tpu.memory_space<vmem>>, %arg4: memref<64x128xf32, #tpu.memory_space<vmem>>) attributes {dimension_semantics = [#tpu.dimension_semantics<parallel>], iteration_bounds = array<i64: 8>, scalar_prefetch = 0 : i64, scratch_operands = 0 : i64, tpu.core_type = #tpu.core_type<tc>, window_params = [{transform_indices = @transform_0, window_bounds = array<i64: 64, 36>}, {pipeline_mode = #tpu.pipeline_mode<synchronous>, transform_indices = @transform_1, window_bounds = array<i64: 36, 128>}, {pipeline_mode = #tpu.pipeline_mode<synchronous>, transform_indices = @transform_2, window_bounds = array<i64: 1, 128>}, {transform_indices = @transform_3, window_bounds = array<i64: 64, 128>}]} {
    %c0 = arith.constant 0 : index
    %c0_0 = arith.constant 0 : index
    %0 = vector.load %arg1[%c0, %c0_0] : memref<64x36xbf16, #tpu.memory_space<vmem>>, vector<64x36xbf16>
    %c0_1 = arith.constant 0 : index
    %c0_2 = arith.constant 0 : index
    %1 = vector.load %arg2[%c0_1, %c0_2] : memref<36x128xbf16, #tpu.memory_space<vmem>>, vector<36x128xbf16>
    %cst = arith.constant dense<0.000000e+00> : vector<64x128xf32>
    %2 = tpu.matmul %0, %1, %cst {dimension_numbers = #tpu.dot_dimension_numbers<[1], [0], [0], [1], [0, 0, 1, 1], [], []>} : vector<64x36xbf16>, vector<36x128xbf16>, vector<64x128xf32> -> vector<64x128xf32>
    %c0_3 = arith.constant 0 : index
    %c0_4 = arith.constant 0 : index
    %3 = vector.load %arg3[%c0_3, %c0_4] : memref<1x128xf32, #tpu.memory_space<vmem>>, vector<1x128xf32>
    %4 = vector.broadcast %3 : vector<1x128xf32> to vector<64x128xf32>
    %5 = arith.addf %2, %4 : vector<64x128xf32>
    %c0_5 = arith.constant 0 : index
    %c0_6 = arith.constant 0 : index
    %6 = vector.load %arg4[%c0_5, %c0_6] : memref<64x128xf32, #tpu.memory_space<vmem>>, vector<64x128xf32>
    tpu.vector_store %arg4[%c0_5, %c0_6], %5 {strides = array<i32>} : memref<64x128xf32, #tpu.memory_space<vmem>>, vector<64x128xf32>,
    return
  }
  func.func @transform_0(%arg0: i32) -> (i32, i32) {
    %c0_i32 = arith.constant 0 : i32
    %c0_i32_0 = arith.constant 0 : i32
    return %arg0, %c0_i32 : i32, i32
  }
  func.func @transform_1(%arg0: i32) -> (i32, i32) {
    %c0_i32 = arith.constant 0 : i32
    %c0_i32_0 = arith.constant 0 : i32
    %c0_i32_1 = arith.constant 0 : i32
    return %c0_i32, %c0_i32_0 : i32, i32
  }
  func.func @transform_2(%arg0: i32) -> (i32, i32) {
    %c0_i32 = arith.constant 0 : i32
    %c0_i32_0 = arith.constant 0 : i32
    %c0_i32_1 = arith.constant 0 : i32
    return %c0_i32, %c0_i32_0 : i32, i32
  }
  func.func @transform_3(%arg0: i32) -> (i32, i32) {
    %c0_i32 = arith.constant 0 : i32
    %c0_i32_0 = arith.constant 0 : i32
    return %arg0, %c0_i32 : i32, i32
  }
}

</mosaic_0001>

<llo_original>
// kernel: control_deformable_conv2d.2
$region0: #{control_deformable_conv2d.2}
  #allocation0 [shape = 'u32[]', space=smem, size = 0x4, offset = 0x4, fixed_abs, tag = 'smem constant byte address 0x4 - core index']
  #allocation1 [shape = 'u32[144,128]{1,0:T(1,128)}', space=vmem, size = 0x12000, scoped, tag = 'internal scratch']
  %s0 = inlined_call_operand.vmem [shape: f32[512,36], index: 0, kind: input, shape index: {}]
  %s1 = inlined_call_operand.vmem [shape: f32[36,128], index: 1, kind: input, shape index: {}]
  %s2 = inlined_call_operand.vmem [shape: f32[1,128], index: 2, kind: input, shape index: {}]
  %s3 = inlined_call_operand.vmem [shape: f32[512,128], index: 3, kind: output, shape index: {}]
  %s4 = sld [smem:[#allocation0]]
  $region45: #{control_deformable_conv2d.2} parent=0
    _
  %s6 = ssub.s32 1, %s4
  %s7 = scalar_select 0, %s6, %s4
  loop: start=0, step=1, limit=10
  $region2: #{control_deformable_conv2d.2} parent=0 // loop_pre_header
    _
  $region3: #{control_deformable_conv2d.2} parent=0 // loop_header
    %s9 = sphi 0, %s13
    %p10 = scmp.ge.s32.totalorder %s9, 10
    %s19 = sphi 0, %s21
    %s22 = sphi 0, %s19
    %s23 = sphi 0, %s22
    %s39 = sphi 0, %s23
    %s43 = sphi 0, %s43
    %s45 = sphi 0, %s43
    %s46 = sphi 0, %s45
    %s60 = sphi 0, %s46
    %s64 = sphi 0, %s64
    %s66 = sphi 0, %s64
    %s67 = sphi 0, %s66
    %s81 = sphi 0, %s67
    %s87 = sphi 0, %s89
    %s90 = sphi 0, %s87
    %s91 = sphi 0, %s90
    %s107 = sphi 0, %s91
  $region4: #{control_deformable_conv2d.2} parent=0 // loop_header_branch
    %12 = sbr.rel (%p10) target = $region8
  $region5: #{control_deformable_conv2d.2} parent=0 // loop_body
    %s14 = ssub.s32 %s9, 1
    %s15 = ssub.s32 %s9, 2
    %s16 = sadd.s32 %s9, 1
    %s17 = ssub.s32 %s9, %s16
    %p18 = scmp.eq.s32.totalorder %s17, 0
    %s20 = sadd.s32 %s19, 1
    %s21 = scalar_select %p18, %s19, %s20
    %p24 = pneg %p18
    %p25 = scmp.eq.s32.totalorder %s9, 7
    %p26 = por %p24, %p25
    %p27 = scmp.ne.s32.totalorder %s19, %s22
    %p28 = scmp.eq.s32.totalorder %s9, 0
    %p29 = por %p27, %p28
    %p30 = scmp.ne.s32.totalorder %s19, %s22
    %p31 = scmp.eq.s32.totalorder %s14, 7
    %p32 = por %p30, %p31
    %p33 = scmp.ne.s32.totalorder %s22, %s23
    %p34 = scmp.eq.s32.totalorder %s14, 0
    %p35 = por %p33, %p34
    %p36 = scmp.ne.s32.totalorder %s22, %s23
    %p37 = scmp.eq.s32.totalorder %s15, 7
    %p38 = por %p36, %p37
    %p40 = scmp.ne.s32.totalorder %s23, %s39
    %p41 = scmp.eq.s32.totalorder %s15, 0
    %p42 = por %p40, %p41
    %s44 = sadd.s32 %s43, 1
    %p47 = scmp.eq.s32.totalorder %s9, 7
    %p48 = scmp.ne.s32.totalorder %s43, %s45
    %p49 = scmp.eq.s32.totalorder %s9, 0
    %p50 = por %p48, %p49
    %p51 = scmp.ne.s32.totalorder %s43, %s45
    %p52 = scmp.eq.s32.totalorder %s14, 7
    %p53 = por %p51, %p52
    %p54 = scmp.ne.s32.totalorder %s45, %s46
    %p55 = scmp.eq.s32.totalorder %s14, 0
    %p56 = por %p54, %p55
    %p57 = scmp.ne.s32.totalorder %s45, %s46
    %p58 = scmp.eq.s32.totalorder %s15, 7
    %p59 = por %p57, %p58
    %p61 = scmp.ne.s32.totalorder %s46, %s60
    %p62 = scmp.eq.s32.totalorder %s15, 0
    %p63 = por %p61, %p62
    %s65 = sadd.s32 %s64, 1
    %p68 = scmp.eq.s32.totalorder %s9, 7
    %p69 = scmp.ne.s32.totalorder %s64, %s66
    %p70 = scmp.eq.s32.totalorder %s9, 0
    %p71 = por %p69, %p70
    %p72 = scmp.ne.s32.totalorder %s64, %s66
    %p73 = scmp.eq.s32.totalorder %s14, 7
    %p74 = por %p72, %p73
    %p75 = scmp.ne.s32.totalorder %s66, %s67
    %p76 = scmp.eq.s32.totalorder %s14, 0
    %p77 = por %p75, %p76
    %p78 = scmp.ne.s32.totalorder %s66, %s67
    %p79 = scmp.eq.s32.totalorder %s15, 7
    %p80 = por %p78, %p79
    %p82 = scmp.ne.s32.totalorder %s67, %s81
    %p83 = scmp.eq.s32.totalorder %s15, 0
    %p84 = por %p82, %p83
    %s85 = ssub.s32 %s9, %s16
    %p86 = scmp.eq.s32.totalorder %s85, 0
    %s88 = sadd.s32 %s87, 1
    %s89 = scalar_select %p86, %s87, %s88
    %p92 = pneg %p86
    %p93 = scmp.eq.s32.totalorder %s9, 7
    %p94 = por %p92, %p93
    %p95 = scmp.ne.s32.totalorder %s87, %s90
    %p96 = scmp.eq.s32.totalorder %s9, 0
    %p97 = por %p95, %p96
    %p98 = scmp.ne.s32.totalorder %s87, %s90
    %p99 = scmp.eq.s32.totalorder %s14, 7
    %p100 = por %p98, %p99
    %p101 = scmp.ne.s32.totalorder %s90, %s91
    %p102 = scmp.eq.s32.totalorder %s14, 0
    %p103 = por %p101, %p102
    %p104 = scmp.ne.s32.totalorder %s90, %s91
    %p105 = scmp.eq.s32.totalorder %s15, 7
    %p106 = por %p104, %p105
    %p108 = scmp.ne.s32.totalorder %s91, %s107
    %p109 = scmp.eq.s32.totalorder %s15, 0
    %p110 = por %p108, %p109
    %p111 = scmp.le.s32.totalorder 1, %s9
    %p112 = scmp.lt.s32.totalorder %s9, 9
    %p113 = pnand %p111, %p112
    %p114 = pneg %p113
    // Predicated region
    $region9: #{control_deformable_conv2d.2} parent=5 // pred_check
      _
    $region10: #{control_deformable_conv2d.2} parent=5 // pred_check_branch
      %116 = sbr.rel (%p113) target = $region12
    $region11: #{control_deformable_conv2d.2} parent=5 // pred_region
      %s117 = ssub.s32 %s9, 1
      // Predicated region
      $region13: #{control_deformable_conv2d.2} parent=11 // pred_check
        %p118 = pneg %p56
      $region14: #{control_deformable_conv2d.2} parent=11 // pred_check_branch
        %120 = sbr.rel (%p118) target = $region16
      $region15: #{control_deformable_conv2d.2} parent=11 // pred_region
        _
      $region16: #{control_deformable_conv2d.2} parent=11 // pred_fallthru
        _
      // Predicated region
      $region17: #{control_deformable_conv2d.2} parent=11 // pred_check
        %p121 = pneg %p77
      $region18: #{control_deformable_conv2d.2} parent=11 // pred_check_branch
        %123 = sbr.rel (%p121) target = $region20
      $region19: #{control_deformable_conv2d.2} parent=11 // pred_region
        _
      $region20: #{control_deformable_conv2d.2} parent=11 // pred_fallthru
        _
    $region12: #{control_deformable_conv2d.2} parent=5 // pred_fallthru
      _
    %p124 = scmp.lt.s32.totalorder %s9, 8
    // Predicated region
    $region21: #{control_deformable_conv2d.2} parent=5 // pred_check
      %p125 = pneg %p124
    $region22: #{control_deformable_conv2d.2} parent=5 // pred_check_branch
      %127 = sbr.rel (%p125) target = $region24
    $region23: #{control_deformable_conv2d.2} parent=5 // pred_region
      // Predicated region
      $region25: #{control_deformable_conv2d.2} parent=23 // pred_check
        %p128 = pneg %p29
      $region26: #{control_deformable_conv2d.2} parent=23 // pred_check_branch
        %130 = sbr.rel (%p128) target = $region28
      $region27: #{control_deformable_conv2d.2} parent=23 // pred_region
        %s131 = smul.u32 8, %s9
        %p132 = scmp.lt.s32.totalorder %s131, 63
        %s133 = scalar_select %p132, %s131, 63
        %s134 = smul.addr %s133, 8
        %s135 = scalar_lea.vmem %s0, %s134
        %s136 = smul.u32 8, %s9
      $region28: #{control_deformable_conv2d.2} parent=23 // pred_fallthru
        _
    $region24: #{control_deformable_conv2d.2} parent=5 // pred_fallthru
      _
    %p137 = scmp.le.s32.totalorder 1, %s9
    %p138 = scmp.lt.s32.totalorder %s9, 9
    %p139 = pnand %p137, %p138
    %p140 = pneg %p139
    // Predicated region
    $region29: #{control_deformable_conv2d.2} parent=5 // pred_check
      _
    $region30: #{control_deformable_conv2d.2} parent=5 // pred_check_branch
      %142 = sbr.rel (%p139) target = $region32
    $region31: #{control_deformable_conv2d.2} parent=5 // pred_region
      %s143 = ssub.s32 %s9, 1
      %s144 = smul.u32 8, %s14
      %p145 = scmp.lt.s32.totalorder %s144, 63
      %s146 = scalar_select %p145, %s144, 63
      %s147 = smul.addr %s146, 8
      %s148 = scalar_lea.vmem %s0, %s147
      %p149 = pneg %p35
      %p150 = pneg %p32
      %p151 = pneg %p56
      %p152 = pneg %p53
      %p153 = pneg %p77
      %p154 = pneg %p74
      %p155 = pneg %p103
      %p156 = pneg %p100
      %s157 = smul.u32 8, %s14
      %p158 = scmp.lt.s32.totalorder %s157, 63
      %s159 = scalar_select %p158, %s157, 63
      %s160 = smul.addr %s159, 8
      %s161 = scalar_lea.vmem %s3, %s160
      %s162 = smul.u32 8, %s14
      %p163 = scmp.lt.s32.totalorder %s162, 63
      %s164 = scalar_select %p163, %s162, 63
      %s165 = smul.addr %s164, 8
      %s166 = scalar_lea.vmem %s0, %s165
      %s167 = smul.u32 8, %s14
      %s168 = smul.u32 8, %s14
      %p169 = scmp.lt.s32.totalorder %s168, 63
      %s170 = scalar_select %p169, %s168, 63
      %s171 = smul.addr %s170, 8
      %s172 = scalar_lea.vmem %s3, %s171
      %s173 = smul.u32 8, %s14
      %v174 = vld [vmem:[%s166] sm:$0xff]
      %v175 = vld [vmem:[%s166 + $0x8] sm:$0xff]
      %v176 = vld [vmem:[%s166 + $0x10] sm:$0xff]
      %v177 = vld [vmem:[%s166 + $0x18] sm:$0xff]
      %v178 = vld [vmem:[%s166 + $0x20] sm:$0xff]
      %v179 = vld [vmem:[%s166 + $0x28] sm:$0xff]
      %v180 = vld [vmem:[%s166 + $0x30] sm:$0xff]
      %v181 = vld [vmem:[%s166 + $0x38] sm:$0xff]
      %v182 = vld [vmem:[%s1] sm:$0xff]
      %v183 = vld [vmem:[%s1 + $0x8] sm:$0xff]
      %v184 = vld [vmem:[%s1 + $0x10] sm:$0xff]
      %v185 = vld [vmem:[%s1 + $0x18] sm:$0xff]
      %v186 = vld [vmem:[%s1 + $0x20] sm:$0xf]
      %v187 = vld [vmem:[%s2] sm:$0x1]
      %v189 = vlaneseq
      %v190 = vshrl.u32 %v189, 7
      %v191 = vsub.s32 0, %v190
      %v192 = vrot.slane %v187, %v191
      %vm194 = vcmask 293888
      %v196 = vsel %vm194, %v174, 0
      %v199 = vsel %vm194, %v175, 0
      %v202 = vsel %vm194, %v176, 0
      %v205 = vsel %vm194, %v177, 0
      %v208 = vsel %vm194, %v178, 0
      %v211 = vsel %vm194, %v179, 0
      %v214 = vsel %vm194, %v180, 0
      %v217 = vsel %vm194, %v181, 0
      %vm219 = vcmask 1043456
      %v221 = vsel %vm219, %v186, 0
      %223 = vmatprep.subr.mxu0 0.0
      %224 = vmatpush1.msra.mxu0 %v182
      %225 = vmatprep.subr.mxu0 0.0
      %226 = vmatpush1.msra.mxu0 %v183
      %227 = vmatprep.subr.mxu0 0.0
      %228 = vmatpush1.msra.mxu0 %v184
      %229 = vmatprep.subr.mxu0 0.0
      %230 = vmatpush1.msra.mxu0 %v185
      %231 = vmatprep.subr.mxu0 0.0
      %232 = vmatpush1.msra.mxu0 %v221
      %233 = vmatprep.subr.mxu0 0.0
      %234 = vmatpush1.msra.mxu0 0.0
      %235 = vmatprep.subr.mxu0 0.0
      %236 = vmatpush1.msra.mxu0 0.0
      %237 = vmatprep.subr.mxu0 0.0
      %238 = vmatpush1.msra.mxu0 0.0
      %239 = vmatprep.subr.mxu0 0.0
      %240 = vmatpush1.msra.mxu0 0.0
      %241 = vmatprep.subr.mxu0 0.0
      %242 = vmatpush1.msra.mxu0 0.0
      %243 = vmatprep.subr.mxu0 0.0
      %244 = vmatpush1.msra.mxu0 0.0
      %245 = vmatprep.subr.mxu0 0.0
      %246 = vmatpush1.msra.mxu0 0.0
      %247 = vmatprep.subr.mxu0 0.0
      %248 = vmatpush1.msra.mxu0 0.0
      %249 = vmatprep.subr.mxu0 0.0
      %250 = vmatpush1.msra.mxu0 0.0
      %251 = vmatprep.subr.mxu0 0.0
      %252 = vmatpush1.msra.mxu0 0.0
      %253 = vmatprep.subr.mxu0 0.0
      %254 = vmatpush1.msra.mxu0 0.0
      %255 = vmatprep.subr.mxu0 0.0
      %256 = vmatpush1.msra.mxu0 0.0
      %257 = vmatprep.subr.mxu0 0.0
      %258 = vmatpush1.msra.mxu0 0.0
      %259 = vmatprep.subr.mxu0 0.0
      %260 = vmatpush1.msra.mxu0 0.0
      %261 = vmatprep.subr.mxu0 0.0
      %262 = vmatpush1.msra.mxu0 0.0
      %263 = vmatprep.subr.mxu0 0.0
      %264 = vmatpush1.msra.mxu0 0.0
      %265 = vmatprep.subr.mxu0 0.0
      %266 = vmatpush1.msra.mxu0 0.0
      %267 = vmatprep.subr.mxu0 0.0
      %268 = vmatpush1.msra.mxu0 0.0
      %269 = vmatprep.subr.mxu0 0.0
      %270 = vmatpush1.msra.mxu0 0.0
      %271 = vmatprep.subr.mxu0 0.0
      %272 = vmatpush1.msra.mxu0 0.0
      %273 = vmatprep.subr.mxu0 0.0
      %274 = vmatpush1.msra.mxu0 0.0
      %275 = vmatprep.subr.mxu0 0.0
      %276 = vmatpush1.msra.mxu0 0.0
      %277 = vmatprep.subr.mxu0 0.0
      %278 = vmatpush1.msra.mxu0 0.0
      %279 = vmatprep.subr.mxu0 0.0
      %280 = vmatpush1.msra.mxu0 0.0
      %281 = vmatprep.subr.mxu0 0.0
      %282 = vmatpush1.msra.mxu0 0.0
      %283 = vmatprep.subr.mxu0 0.0
      %284 = vmatpush1.msra.mxu0 0.0
      %285 = vmatprep.subr.mxu0 0.0
      %286 = vmatpush1.msra.mxu0 0.0
      %287 = vmatprep.mubr.f32.mxu0 0.0
      %288 = vmatmul.mubr.f32.gmra.mrb[0].mxu0 %v196
      %v289 = vpop.f32.mrb[0].mxu0
      %v290 = vadd.f32 %v192, %v289
      %v291 = vpop.f32.mrb[0].mxu0
      %292 = vmatprep.mubr.f32.mxu0 0.0
      %293 = vmatmul.mubr.f32.gmra.mrb[0].mxu0 %v199
      %v294 = vpop.f32.mrb[0].mxu0
      %v295 = vadd.f32 %v192, %v294
      %v296 = vpop.f32.mrb[0].mxu0
      %297 = vmatprep.mubr.f32.mxu0 0.0
      %298 = vmatmul.mubr.f32.gmra.mrb[0].mxu0 %v202
      %v299 = vpop.f32.mrb[0].mxu0
      %v300 = vadd.f32 %v192, %v299
      %v301 = vpop.f32.mrb[0].mxu0
      %302 = vmatprep.mubr.f32.mxu0 0.0
      %303 = vmatmul.mubr.f32.gmra.mrb[0].mxu0 %v205
      %v304 = vpop.f32.mrb[0].mxu0
      %v305 = vadd.f32 %v192, %v304
      %v306 = vpop.f32.mrb[0].mxu0
      %307 = vmatprep.mubr.f32.mxu0 0.0
      %308 = vmatmul.mubr.f32.gmra.mrb[0].mxu0 %v208
      %v309 = vpop.f32.mrb[0].mxu0
      %v310 = vadd.f32 %v192, %v309
      %v311 = vpop.f32.mrb[0].mxu0
      %312 = vmatprep.mubr.f32.mxu0 0.0
      %313 = vmatmul.mubr.f32.gmra.mrb[0].mxu0 %v211
      %v314 = vpop.f32.mrb[0].mxu0
      %v315 = vadd.f32 %v192, %v314
      %v316 = vpop.f32.mrb[0].mxu0
      %317 = vmatprep.mubr.f32.mxu0 0.0
      %318 = vmatmul.mubr.f32.gmra.mrb[0].mxu0 %v214
      %v319 = vpop.f32.mrb[0].mxu0
      %v320 = vadd.f32 %v192, %v319
      %v321 = vpop.f32.mrb[0].mxu0
      %322 = vmatprep.mubr.f32.mxu0 0.0
      %323 = vmatmul.mubr.f32.gmra.mrb[0].mxu0 %v217
      %v324 = vpop.f32.mrb[0].mxu0
      %v325 = vadd.f32 %v192, %v324
      %v326 = vpop.f32.mrb[0].mxu0
      %327 = vdwg.mxu0
      %v328 = vlaneseq
      %v329 = vand.u32 %v328, 127
      %vm330 = vcmp.lt.s32.totalorder %v329, 18
      %v331 = vmul.f32 %v290, 0.5
      %v332 = vmul.f32 %v295, 0.5
      %v333 = vmul.f32 %v300, 0.5
      %v334 = vmul.f32 %v305, 0.5
      %v335 = vmul.f32 %v310, 0.5
      %v336 = vmul.f32 %v315, 0.5
      %v337 = vmul.f32 %v320, 0.5
      %v338 = vmul.f32 %v325, 0.5
      %v339 = vtanh.pop %v331
      %v340 = vtanh.pop %v332
      %v341 = vtanh.pop %v333
      %v342 = vtanh.pop %v334
      %v343 = vtanh.pop %v335
      %v344 = vtanh.pop %v336
      %v345 = vtanh.pop %v337
      %v346 = vtanh.pop %v338
      %v347 = vadd.f32 %v339, 1.0
      %v348 = vadd.f32 %v340, 1.0
      %v349 = vadd.f32 %v341, 1.0
      %v350 = vadd.f32 %v342, 1.0
      %v351 = vadd.f32 %v343, 1.0
      %v352 = vadd.f32 %v344, 1.0
      %v353 = vadd.f32 %v345, 1.0
      %v354 = vadd.f32 %v346, 1.0
      %v355 = vsel %vm330, %v290, %v347
      %v356 = vsel %vm330, %v295, %v348
      %v357 = vsel %vm330, %v300, %v349
      %v358 = vsel %vm330, %v305, %v350
      %v359 = vsel %vm330, %v310, %v351
      %v360 = vsel %vm330, %v315, %v352
      %v361 = vsel %vm330, %v320, %v353
      %v362 = vsel %vm330, %v325, %v354
      %363 = vst [vmem:[%s172] sm:$0xff] %v355
      %364 = vst [vmem:[%s172 + $0x8] sm:$0xff] %v356
      %365 = vst [vmem:[%s172 + $0x10] sm:$0xff] %v357
      %366 = vst [vmem:[%s172 + $0x18] sm:$0xff] %v358
      %367 = vst [vmem:[%s172 + $0x20] sm:$0xff] %v359
      %368 = vst [vmem:[%s172 + $0x28] sm:$0xff] %v360
      %369 = vst [vmem:[%s172 + $0x30] sm:$0xff] %v361
      %370 = vst [vmem:[%s172 + $0x38] sm:$0xff] %v362
      %s371 = smul.u32 8, %s14
      %p372 = scmp.lt.s32.totalorder %s371, 63
      %s373 = scalar_select %p372, %s371, 63
      %s374 = smul.addr %s373, 8
      %s375 = scalar_lea.vmem %s3, %s374
      // Predicated region
      $region33: #{control_deformable_conv2d.2} parent=31 // pred_check
        %p376 = pneg %p100
      $region34: #{control_deformable_conv2d.2} parent=31 // pred_check_branch
        %378 = sbr.rel (%p376) target = $region36
      $region35: #{control_deformable_conv2d.2} parent=31 // pred_region
        %s379 = smul.u32 8, %s14
      $region36: #{control_deformable_conv2d.2} parent=31 // pred_fallthru
        _
    $region32: #{control_deformable_conv2d.2} parent=5 // pred_fallthru
      _
    %p380 = scmp.le.s32.totalorder 2, %s9
    // Predicated region
    $region37: #{control_deformable_conv2d.2} parent=5 // pred_check
      %p381 = pneg %p380
    $region38: #{control_deformable_conv2d.2} parent=5 // pred_check_branch
      %383 = sbr.rel (%p381) target = $region40
    $region39: #{control_deformable_conv2d.2} parent=5 // pred_region
      %s384 = ssub.s32 %s9, 2
      // Predicated region
      $region41: #{control_deformable_conv2d.2} parent=39 // pred_check
        %p385 = pneg %p106
      $region42: #{control_deformable_conv2d.2} parent=39 // pred_check_branch
        %387 = sbr.rel (%p385) target = $region44
      $region43: #{control_deformable_conv2d.2} parent=39 // pred_region
        %s388 = smul.u32 8, %s15
        %p389 = scmp.lt.s32.totalorder %s388, 63
        %s390 = scalar_select %p389, %s388, 63
        %s391 = smul.addr %s390, 8
        %s392 = scalar_lea.vmem %s3, %s391
      $region44: #{control_deformable_conv2d.2} parent=39 // pred_fallthru
        _
    $region40: #{control_deformable_conv2d.2} parent=5 // pred_fallthru
      _
  $region6: #{control_deformable_conv2d.2} parent=0 // loop_footer
    %s13 = sadd.s32 1, %s9
  $region7: #{control_deformable_conv2d.2} parent=0 // loop_footer_branch
    %8 = sbr.rel target = $region3
  $region8: #{control_deformable_conv2d.2} parent=0 // loop_exit
    _

// kernel: control_deformable_conv2d.3
$region0: #{control_deformable_conv2d.3}
  #allocation0 [shape = 'u32[]', space=smem, size = 0x4, offset = 0x4, fixed_abs, tag = 'smem constant byte address 0x4 - core index']
  #allocation1 [shape = 'u32[144,128]{1,0:T(1,128)}', space=vmem, size = 0x12000, scoped, tag = 'internal scratch']
  %s0 = inlined_call_operand.vmem [shape: bf16[512,36], index: 0, kind: input, shape index: {}]
  %s1 = inlined_call_operand.vmem [shape: bf16[36,128], index: 1, kind: input, shape index: {}]
  %s2 = inlined_call_operand.vmem [shape: f32[1,128], index: 2, kind: input, shape index: {}]
  %s3 = inlined_call_operand.vmem [shape: f32[512,128], index: 3, kind: output, shape index: {}]
  %s4 = sld [smem:[#allocation0]]
  $region45: #{control_deformable_conv2d.3} parent=0
    _
  %s6 = ssub.s32 1, %s4
  %s7 = scalar_select 0, %s6, %s4
  loop: start=0, step=1, limit=10
  $region2: #{control_deformable_conv2d.3} parent=0 // loop_pre_header
    _
  $region3: #{control_deformable_conv2d.3} parent=0 // loop_header
    %s9 = sphi 0, %s13
    %p10 = scmp.ge.s32.totalorder %s9, 10
    %s19 = sphi 0, %s21
    %s22 = sphi 0, %s19
    %s23 = sphi 0, %s22
    %s39 = sphi 0, %s23
    %s43 = sphi 0, %s43
    %s45 = sphi 0, %s43
    %s46 = sphi 0, %s45
    %s60 = sphi 0, %s46
    %s64 = sphi 0, %s64
    %s66 = sphi 0, %s64
    %s67 = sphi 0, %s66
    %s81 = sphi 0, %s67
    %s87 = sphi 0, %s89
    %s90 = sphi 0, %s87
    %s91 = sphi 0, %s90
    %s107 = sphi 0, %s91
  $region4: #{control_deformable_conv2d.3} parent=0 // loop_header_branch
    %12 = sbr.rel (%p10) target = $region8
  $region5: #{control_deformable_conv2d.3} parent=0 // loop_body
    %s14 = ssub.s32 %s9, 1
    %s15 = ssub.s32 %s9, 2
    %s16 = sadd.s32 %s9, 1
    %s17 = ssub.s32 %s9, %s16
    %p18 = scmp.eq.s32.totalorder %s17, 0
    %s20 = sadd.s32 %s19, 1
    %s21 = scalar_select %p18, %s19, %s20
    %p24 = pneg %p18
    %p25 = scmp.eq.s32.totalorder %s9, 7
    %p26 = por %p24, %p25
    %p27 = scmp.ne.s32.totalorder %s19, %s22
    %p28 = scmp.eq.s32.totalorder %s9, 0
    %p29 = por %p27, %p28
    %p30 = scmp.ne.s32.totalorder %s19, %s22
    %p31 = scmp.eq.s32.totalorder %s14, 7
    %p32 = por %p30, %p31
    %p33 = scmp.ne.s32.totalorder %s22, %s23
    %p34 = scmp.eq.s32.totalorder %s14, 0
    %p35 = por %p33, %p34
    %p36 = scmp.ne.s32.totalorder %s22, %s23
    %p37 = scmp.eq.s32.totalorder %s15, 7
    %p38 = por %p36, %p37
    %p40 = scmp.ne.s32.totalorder %s23, %s39
    %p41 = scmp.eq.s32.totalorder %s15, 0
    %p42 = por %p40, %p41
    %s44 = sadd.s32 %s43, 1
    %p47 = scmp.eq.s32.totalorder %s9, 7
    %p48 = scmp.ne.s32.totalorder %s43, %s45
    %p49 = scmp.eq.s32.totalorder %s9, 0
    %p50 = por %p48, %p49
    %p51 = scmp.ne.s32.totalorder %s43, %s45
    %p52 = scmp.eq.s32.totalorder %s14, 7
    %p53 = por %p51, %p52
    %p54 = scmp.ne.s32.totalorder %s45, %s46
    %p55 = scmp.eq.s32.totalorder %s14, 0
    %p56 = por %p54, %p55
    %p57 = scmp.ne.s32.totalorder %s45, %s46
    %p58 = scmp.eq.s32.totalorder %s15, 7
    %p59 = por %p57, %p58
    %p61 = scmp.ne.s32.totalorder %s46, %s60
    %p62 = scmp.eq.s32.totalorder %s15, 0
    %p63 = por %p61, %p62
    %s65 = sadd.s32 %s64, 1
    %p68 = scmp.eq.s32.totalorder %s9, 7
    %p69 = scmp.ne.s32.totalorder %s64, %s66
    %p70 = scmp.eq.s32.totalorder %s9, 0
    %p71 = por %p69, %p70
    %p72 = scmp.ne.s32.totalorder %s64, %s66
    %p73 = scmp.eq.s32.totalorder %s14, 7
    %p74 = por %p72, %p73
    %p75 = scmp.ne.s32.totalorder %s66, %s67
    %p76 = scmp.eq.s32.totalorder %s14, 0
    %p77 = por %p75, %p76
    %p78 = scmp.ne.s32.totalorder %s66, %s67
    %p79 = scmp.eq.s32.totalorder %s15, 7
    %p80 = por %p78, %p79
    %p82 = scmp.ne.s32.totalorder %s67, %s81
    %p83 = scmp.eq.s32.totalorder %s15, 0
    %p84 = por %p82, %p83
    %s85 = ssub.s32 %s9, %s16
    %p86 = scmp.eq.s32.totalorder %s85, 0
    %s88 = sadd.s32 %s87, 1
    %s89 = scalar_select %p86, %s87, %s88
    %p92 = pneg %p86
    %p93 = scmp.eq.s32.totalorder %s9, 7
    %p94 = por %p92, %p93
    %p95 = scmp.ne.s32.totalorder %s87, %s90
    %p96 = scmp.eq.s32.totalorder %s9, 0
    %p97 = por %p95, %p96
    %p98 = scmp.ne.s32.totalorder %s87, %s90
    %p99 = scmp.eq.s32.totalorder %s14, 7
    %p100 = por %p98, %p99
    %p101 = scmp.ne.s32.totalorder %s90, %s91
    %p102 = scmp.eq.s32.totalorder %s14, 0
    %p103 = por %p101, %p102
    %p104 = scmp.ne.s32.totalorder %s90, %s91
    %p105 = scmp.eq.s32.totalorder %s15, 7
    %p106 = por %p104, %p105
    %p108 = scmp.ne.s32.totalorder %s91, %s107
    %p109 = scmp.eq.s32.totalorder %s15, 0
    %p110 = por %p108, %p109
    %p111 = scmp.le.s32.totalorder 1, %s9
    %p112 = scmp.lt.s32.totalorder %s9, 9
    %p113 = pnand %p111, %p112
    %p114 = pneg %p113
    // Predicated region
    $region9: #{control_deformable_conv2d.3} parent=5 // pred_check
      _
    $region10: #{control_deformable_conv2d.3} parent=5 // pred_check_branch
      %116 = sbr.rel (%p113) target = $region12
    $region11: #{control_deformable_conv2d.3} parent=5 // pred_region
      %s117 = ssub.s32 %s9, 1
      // Predicated region
      $region13: #{control_deformable_conv2d.3} parent=11 // pred_check
        %p118 = pneg %p56
      $region14: #{control_deformable_conv2d.3} parent=11 // pred_check_branch
        %120 = sbr.rel (%p118) target = $region16
      $region15: #{control_deformable_conv2d.3} parent=11 // pred_region
        _
      $region16: #{control_deformable_conv2d.3} parent=11 // pred_fallthru
        _
      // Predicated region
      $region17: #{control_deformable_conv2d.3} parent=11 // pred_check
        %p121 = pneg %p77
      $region18: #{control_deformable_conv2d.3} parent=11 // pred_check_branch
        %123 = sbr.rel (%p121) target = $region20
      $region19: #{control_deformable_conv2d.3} parent=11 // pred_region
        _
      $region20: #{control_deformable_conv2d.3} parent=11 // pred_fallthru
        _
    $region12: #{control_deformable_conv2d.3} parent=5 // pred_fallthru
      _
    %p124 = scmp.lt.s32.totalorder %s9, 8
    // Predicated region
    $region21: #{control_deformable_conv2d.3} parent=5 // pred_check
      %p125 = pneg %p124
    $region22: #{control_deformable_conv2d.3} parent=5 // pred_check_branch
      %127 = sbr.rel (%p125) target = $region24
    $region23: #{control_deformable_conv2d.3} parent=5 // pred_region
      // Predicated region
      $region25: #{control_deformable_conv2d.3} parent=23 // pred_check
        %p128 = pneg %p29
      $region26: #{control_deformable_conv2d.3} parent=23 // pred_check_branch
        %130 = sbr.rel (%p128) target = $region28
      $region27: #{control_deformable_conv2d.3} parent=23 // pred_region
        %s131 = smul.u32 8, %s9
        %p132 = scmp.lt.s32.totalorder %s131, 63
        %s133 = scalar_select %p132, %s131, 63
        %s134 = smul.addr %s133, 4
        %s135 = scalar_lea.vmem %s0, %s134
        %s136 = smul.u32 8, %s9
      $region28: #{control_deformable_conv2d.3} parent=23 // pred_fallthru
        _
    $region24: #{control_deformable_conv2d.3} parent=5 // pred_fallthru
      _
    %p137 = scmp.le.s32.totalorder 1, %s9
    %p138 = scmp.lt.s32.totalorder %s9, 9
    %p139 = pnand %p137, %p138
    %p140 = pneg %p139
    // Predicated region
    $region29: #{control_deformable_conv2d.3} parent=5 // pred_check
      _
    $region30: #{control_deformable_conv2d.3} parent=5 // pred_check_branch
      %142 = sbr.rel (%p139) target = $region32
    $region31: #{control_deformable_conv2d.3} parent=5 // pred_region
      %s143 = ssub.s32 %s9, 1
      %s144 = smul.u32 8, %s14
      %p145 = scmp.lt.s32.totalorder %s144, 63
      %s146 = scalar_select %p145, %s144, 63
      %s147 = smul.addr %s146, 4
      %s148 = scalar_lea.vmem %s0, %s147
      %p149 = pneg %p35
      %p150 = pneg %p32
      %p151 = pneg %p56
      %p152 = pneg %p53
      %p153 = pneg %p77
      %p154 = pneg %p74
      %p155 = pneg %p103
      %p156 = pneg %p100
      %s157 = smul.u32 8, %s14
      %p158 = scmp.lt.s32.totalorder %s157, 63
      %s159 = scalar_select %p158, %s157, 63
      %s160 = smul.addr %s159, 8
      %s161 = scalar_lea.vmem %s3, %s160
      %s162 = smul.u32 8, %s14
      %p163 = scmp.lt.s32.totalorder %s162, 63
      %s164 = scalar_select %p163, %s162, 63
      %s165 = smul.addr %s164, 4
      %s166 = scalar_lea.vmem %s0, %s165
      %s167 = smul.u32 8, %s14
      %s168 = smul.u32 8, %s14
      %p169 = scmp.lt.s32.totalorder %s168, 63
      %s170 = scalar_select %p169, %s168, 63
      %s171 = smul.addr %s170, 8
      %s172 = scalar_lea.vmem %s3, %s171
      %s173 = smul.u32 8, %s14
      %v175 = vld [vmem:[%s166] sm:$0xf]
      %v176 = vld [vmem:[%s166 + $0x4] sm:$0xf]
      %v177 = vld [vmem:[%s166 + $0x8] sm:$0xf]
      %v178 = vld [vmem:[%s166 + $0xc] sm:$0xf]
      %v179 = vld [vmem:[%s166 + $0x10] sm:$0xf]
      %v180 = vld [vmem:[%s166 + $0x14] sm:$0xf]
      %v181 = vld [vmem:[%s166 + $0x18] sm:$0xf]
      %v182 = vld [vmem:[%s166 + $0x1c] sm:$0xf]
      %v183 = vld [vmem:[%s1] sm:$0xf]
      %v184 = vld [vmem:[%s1 + $0x4] sm:$0xf]
      %v185 = vld [vmem:[%s1 + $0x8] sm:$0xf]
      %v186 = vld [vmem:[%s1 + $0xc] sm:$0xf]
      %v187 = vld [vmem:[%s1 + $0x10] sm:$0x3]
      %v188 = vld [vmem:[%s2] sm:$0x1]
      %v190 = vlaneseq
      %v191 = vshrl.u32 %v190, 7
      %v192 = vsub.s32 0, %v191
      %v193 = vrot.slane %v188, %v192
      %v203 = vunpack.c.l.b16 %v175
      %v204 = vunpack.c.l.b16 %v176
      %v205 = vunpack.c.l.b16 %v177
      %v206 = vunpack.c.l.b16 %v178
      %v207 = vunpack.c.l.b16 %v179
      %v208 = vunpack.c.l.b16 %v180
      %v209 = vunpack.c.l.b16 %v181
      %v210 = vunpack.c.l.b16 %v182
      %v211 = vpack.c.b16 %v204, %v203
      %v212 = vpack.c.b16 %v206, %v205
      %v213 = vpack.c.b16 %v208, %v207
      %v214 = vpack.c.b16 %v210, %v209
      %v220 = vunpack.c.l.b16 %v183
      %v221 = vunpack.c.l.b16 %v184
      %v222 = vunpack.c.l.b16 %v185
      %v223 = vunpack.c.l.b16 %v186
      %v224 = vunpack.c.l.b16 %v187
      %v225 = vpack.c.b16 %v221, %v220
      %v226 = vpack.c.b16 %v223, %v222
      %v227 = vpack.c.b16 %v224, %v224
      %vm230 = vcmask 293888
      %v232 = vsel %vm230, %v211, 0
      %v235 = vsel %vm230, %v212, 0
      %v238 = vsel %vm230, %v213, 0
      %v241 = vsel %vm230, %v214, 0
      %vm243 = vcmask 1041408
      %v245 = vsel %vm243, %v227, 0
      %247 = vmatprep.subr.bf16.mxu0 0
      %248 = vmatpush1.bf16.msra.mxu0 %v225
      %249 = vmatprep.subr.bf16.mxu0 0
      %250 = vmatpush1.bf16.msra.mxu0 %v226
      %251 = vmatprep.subr.bf16.mxu0 0
      %252 = vmatpush1.bf16.msra.mxu0 %v245
      %253 = vmatprep.subr.bf16.mxu0 0
      %254 = vmatpush1.bf16.msra.mxu0 0
      %255 = vmatprep.subr.bf16.mxu0 0
      %256 = vmatpush1.bf16.msra.mxu0 0
      %257 = vmatprep.subr.bf16.mxu0 0
      %258 = vmatpush1.bf16.msra.mxu0 0
      %259 = vmatprep.subr.bf16.mxu0 0
      %260 = vmatpush1.bf16.msra.mxu0 0
      %261 = vmatprep.subr.bf16.mxu0 0
      %262 = vmatpush1.bf16.msra.mxu0 0
      %263 = vmatprep.subr.bf16.mxu0 0
      %264 = vmatpush1.bf16.msra.mxu0 0
      %265 = vmatprep.subr.bf16.mxu0 0
      %266 = vmatpush1.bf16.msra.mxu0 0
      %267 = vmatprep.subr.bf16.mxu0 0
      %268 = vmatpush1.bf16.msra.mxu0 0
      %269 = vmatprep.subr.bf16.mxu0 0
      %270 = vmatpush1.bf16.msra.mxu0 0
      %271 = vmatprep.subr.bf16.mxu0 0
      %272 = vmatpush1.bf16.msra.mxu0 0
      %273 = vmatprep.subr.bf16.mxu0 0
      %274 = vmatpush1.bf16.msra.mxu0 0
      %275 = vmatprep.subr.bf16.mxu0 0
      %276 = vmatpush1.bf16.msra.mxu0 0
      %277 = vmatprep.subr.bf16.mxu0 0
      %278 = vmatpush1.bf16.msra.mxu0 0
      %279 = vmatprep.mubr.bf16.mxu0 0
      %280 = vmatmul.mubr.bf16.gmra.mrb[0].mxu0 %v232
      %v281 = vpop.f32.mrb[0].mxu0
      %v282 = vadd.f32 %v193, %v281
      %v283 = vpop.f32.mrb[0].mxu0
      %v284 = vpop.f32.mrb[0].mxu0
      %v285 = vadd.f32 %v193, %v284
      %v286 = vpop.f32.mrb[0].mxu0
      %287 = vmatprep.mubr.bf16.mxu0 0
      %288 = vmatmul.mubr.bf16.gmra.mrb[0].mxu0 %v235
      %v289 = vpop.f32.mrb[0].mxu0
      %v290 = vadd.f32 %v193, %v289
      %v291 = vpop.f32.mrb[0].mxu0
      %v292 = vpop.f32.mrb[0].mxu0
      %v293 = vadd.f32 %v193, %v292
      %v294 = vpop.f32.mrb[0].mxu0
      %295 = vmatprep.mubr.bf16.mxu0 0
      %296 = vmatmul.mubr.bf16.gmra.mrb[0].mxu0 %v238
      %v297 = vpop.f32.mrb[0].mxu0
      %v298 = vadd.f32 %v193, %v297
      %v299 = vpop.f32.mrb[0].mxu0
      %v300 = vpop.f32.mrb[0].mxu0
      %v301 = vadd.f32 %v193, %v300
      %v302 = vpop.f32.mrb[0].mxu0
      %303 = vmatprep.mubr.bf16.mxu0 0
      %304 = vmatmul.mubr.bf16.gmra.mrb[0].mxu0 %v241
      %v305 = vpop.f32.mrb[0].mxu0
      %v306 = vadd.f32 %v193, %v305
      %v307 = vpop.f32.mrb[0].mxu0
      %v308 = vpop.f32.mrb[0].mxu0
      %v309 = vadd.f32 %v193, %v308
      %v310 = vpop.f32.mrb[0].mxu0
      %311 = vdwg.mxu0
      %312 = vst [vmem:[%s172] sm:$0xff] %v282
      %313 = vst [vmem:[%s172 + $0x8] sm:$0xff] %v285
      %314 = vst [vmem:[%s172 + $0x10] sm:$0xff] %v290
      %315 = vst [vmem:[%s172 + $0x18] sm:$0xff] %v293
      %316 = vst [vmem:[%s172 + $0x20] sm:$0xff] %v298
      %317 = vst [vmem:[%s172 + $0x28] sm:$0xff] %v301
      %318 = vst [vmem:[%s172 + $0x30] sm:$0xff] %v306
      %319 = vst [vmem:[%s172 + $0x38] sm:$0xff] %v309
      %s320 = smul.u32 8, %s14
      %p321 = scmp.lt.s32.totalorder %s320, 63
      %s322 = scalar_select %p321, %s320, 63
      %s323 = smul.addr %s322, 8
      %s324 = scalar_lea.vmem %s3, %s323
      // Predicated region
      $region33: #{control_deformable_conv2d.3} parent=31 // pred_check
        %p325 = pneg %p100
      $region34: #{control_deformable_conv2d.3} parent=31 // pred_check_branch
        %327 = sbr.rel (%p325) target = $region36
      $region35: #{control_deformable_conv2d.3} parent=31 // pred_region
        %s328 = smul.u32 8, %s14
      $region36: #{control_deformable_conv2d.3} parent=31 // pred_fallthru
        _
    $region32: #{control_deformable_conv2d.3} parent=5 // pred_fallthru
      _
    %p329 = scmp.le.s32.totalorder 2, %s9
    // Predicated region
    $region37: #{control_deformable_conv2d.3} parent=5 // pred_check
      %p330 = pneg %p329
    $region38: #{control_deformable_conv2d.3} parent=5 // pred_check_branch
      %332 = sbr.rel (%p330) target = $region40
    $region39: #{control_deformable_conv2d.3} parent=5 // pred_region
      %s333 = ssub.s32 %s9, 2
      // Predicated region
      $region41: #{control_deformable_conv2d.3} parent=39 // pred_check
        %p334 = pneg %p106
      $region42: #{control_deformable_conv2d.3} parent=39 // pred_check_branch
        %336 = sbr.rel (%p334) target = $region44
      $region43: #{control_deformable_conv2d.3} parent=39 // pred_region
        %s337 = smul.u32 8, %s15
        %p338 = scmp.lt.s32.totalorder %s337, 63
        %s339 = scalar_select %p338, %s337, 63
        %s340 = smul.addr %s339, 8
        %s341 = scalar_lea.vmem %s3, %s340
      $region44: #{control_deformable_conv2d.3} parent=39 // pred_fallthru
        _
    $region40: #{control_deformable_conv2d.3} parent=5 // pred_fallthru
      _
  $region6: #{control_deformable_conv2d.3} parent=0 // loop_footer
    %s13 = sadd.s32 1, %s9
  $region7: #{control_deformable_conv2d.3} parent=0 // loop_footer_branch
    %8 = sbr.rel target = $region3
  $region8: #{control_deformable_conv2d.3} parent=0 // loop_exit
    _

</llo_original>
